<compile_context>
chip_gen: v6e
topology: v6e:2x2x1
jax: 0.10.0
libtpu: 0.0.40
codegen_flags: <defaults>
</compile_context>

<pallas_src>
import functools
import math

import jax
import jax.numpy as jnp
from jax import lax
from jax.experimental import pallas as pl
from jax.experimental.pallas import tpu as pltpu


def _tile(dim, target, align):
    """Largest multiple of `align` <= target that divides `dim`, else the full dim."""
    if dim <= target:
        return dim
    t = (target // align) * align
    while t >= align:
        if dim % t == 0:
            return t
        t -= align
    # TODO(synk): falls back to the full dimension when no aligned divisor
    # exists (odd/prime dims); a cdiv grid with masked tails would bound VMEM.
    return dim


# ----------------------------- Linear (GEMM) ---------------------------------
def _linear_kernel(x_ref, w_ref, b_ref, o_ref, acc_ref):
    k = pl.program_id(2)

    @pl.when(k == 0)
    def _():
        acc_ref[...] = jnp.zeros_like(acc_ref)

    # Operands arrive bf16 from the wrapper -> native MXU path; f32 accumulator.
    acc_ref[...] += jnp.dot(
        x_ref[...], w_ref[...], preferred_element_type=jnp.float32)

    @pl.when(k == pl.num_programs(2) - 1)
    def _():
        o_ref[...] = (acc_ref[...] + b_ref[...].astype(jnp.float32)).astype(o_ref.dtype)


def linear(x2d, w, b, *, out_dtype=None, tm_target=512, tn_target=512,
           tk_target=1024):
    """x2d: (M, K), w: (K, N), b: (N,) -> x2d @ w + b, shape (M, N)."""
    M, K = x2d.shape
    N = w.shape[1]
    if out_dtype is None:
        out_dtype = x2d.dtype
    tm = _tile(M, tm_target, 8)
    tn = _tile(N, tn_target, 128)
    tk = _tile(K, tk_target, 128)
    grid = (M // tm, N // tn, K // tk)
    return pl.pallas_call(
        _linear_kernel,
        out_shape=jax.ShapeDtypeStruct((M, N), out_dtype),
        grid_spec=pltpu.PrefetchScalarGridSpec(
            num_scalar_prefetch=0,
            grid=grid,
            in_specs=[
                pl.BlockSpec((tm, tk), lambda i, j, k: (i, k)),
                pl.BlockSpec((tk, tn), lambda i, j, k: (k, j)),
                pl.BlockSpec((1, tn), lambda i, j, k: (0, j)),
            ],
            out_specs=pl.BlockSpec((tm, tn), lambda i, j, k: (i, j)),
            scratch_shapes=[pltpu.VMEM((tm, tn), jnp.float32)],
        ),
        compiler_params=pltpu.CompilerParams(
            dimension_semantics=("parallel", "parallel", "arbitrary"),
            # Conservative cross-generation cap (fits v7x's 64 MiB part);
            # raise toward 64-96 MiB on v6e/v5e for even bigger tiles.
            vmem_limit_bytes=48 * 1024 * 1024,
        ),
    )(x2d, w, b.reshape(1, N))


# ----------------------- Multi-head attention kernel -------------------------
def _mha_kernel(num_heads, head_dim, q_ref, k_ref, v_ref, o_ref,
                m_sc, l_sc, acc_sc):
    kv_idx = pl.program_id(2)
    H, D = num_heads, head_dim

    @pl.when(kv_idx == 0)
    def _():
        m_sc[...] = jnp.full_like(m_sc, -jnp.inf)
        l_sc[...] = jnp.zeros_like(l_sc)
        acc_sc[...] = jnp.zeros_like(acc_sc)

    # All heads of one (batch, query-tile) handled per grid step.  Heads stay
    # folded in the lane dimension; only the (tq, D)/(tkv, D) slices actually
    # consumed per head are loaded from the VMEM refs (low vreg pressure).
    # TODO(synk): for head_dim not a multiple of 128 these lane slices are not
    # 128-aligned; padding D to 128 in the projection would remove the
    # resulting lane selects (XLU work) at the cost of extra MXU columns.
    for h in range(H):
        lo = h * D
        qh = q_ref[0, :, lo:lo + D]   # (tq, D)   bf16, scale already folded in
        kh = k_ref[0, :, lo:lo + D]   # (tkv, D)  bf16
        vh = v_ref[0, :, lo:lo + D]   # (tkv, D)  bf16

        # Contract the last dims directly (no explicit K transpose).
        s = lax.dot_general(qh, kh, (((1,), (1,)), ((), ())),
                            preferred_element_type=jnp.float32)  # (tq, tkv)

        # Online (flash) softmax update, elementwise math in f32.
        m_prev = m_sc[h]                                          # (tq, 1)
        m_new = jnp.maximum(m_prev, jnp.max(s, axis=-1, keepdims=True))
        alpha = jnp.exp(m_prev - m_new)
        p = jnp.exp(s - m_new)
        l_sc[h] = alpha * l_sc[h] + jnp.sum(p, axis=-1, keepdims=True)
        acc_sc[h] = alpha * acc_sc[h] + jnp.dot(
            p.astype(v_ref.dtype), vh, preferred_element_type=jnp.float32)
        m_sc[h] = m_new

    # TODO(synk): attention dropout is identity (eval-mode semantics); the
    # optional key_padding_mask / attn_bias inputs (None in the default
    # forward) are not implemented.
    @pl.when(kv_idx == pl.num_programs(2) - 1)
    def _():
        for h in range(H):
            inv_l = pl.reciprocal(l_sc[h], approx=True)   # EUP slot
            o_ref[0, :, h * D:(h + 1) * D] = (acc_sc[h] * inv_l).astype(o_ref.dtype)


def attention(qkv, num_heads, head_dim, *, tq_target=256, tkv_target=256):
    """qkv: (B, T, 3E) with heads folded into E -> attention output (B, T, E)."""
    B, T, three_e = qkv.shape
    E = num_heads * head_dim
    assert three_e == 3 * E
    tq = _tile(T, tq_target, 8)
    tkv = _tile(T, tkv_target, 8)
    grid = (B, T // tq, T // tkv)
    kern = functools.partial(_mha_kernel, num_heads, head_dim)

    if E % 128 == 0:
        # Fused path: three BlockSpecs on the SAME qkv array pick the Q/K/V
        # blocks along the last axis -> no wrapper-side slice copies.
        in_specs = [
            pl.BlockSpec((1, tq, E), lambda b, qi, kv: (b, qi, 0)),
            pl.BlockSpec((1, tkv, E), lambda b, qi, kv: (b, kv, 1)),
            pl.BlockSpec((1, tkv, E), lambda b, qi, kv: (b, kv, 2)),
        ]
        args = (qkv, qkv, qkv)
    else:
        # Fallback for lane-unaligned E: a last-dim block of E on the (B,T,3E)
        # array would violate the 128-lane block constraint, so slice in the
        # wrapper (costs one extra HBM round trip of qkv).
        q = qkv[:, :, :E]
        k = qkv[:, :, E:2 * E]
        v = qkv[:, :, 2 * E:]
        in_specs = [
            pl.BlockSpec((1, tq, E), lambda b, qi, kv: (b, qi, 0)),
            pl.BlockSpec((1, tkv, E), lambda b, qi, kv: (b, kv, 0)),
            pl.BlockSpec((1, tkv, E), lambda b, qi, kv: (b, kv, 0)),
        ]
        args = (q, k, v)

    return pl.pallas_call(
        kern,
        out_shape=jax.ShapeDtypeStruct((B, T, E), qkv.dtype),
        grid_spec=pltpu.PrefetchScalarGridSpec(
            num_scalar_prefetch=0,
            grid=grid,
            in_specs=in_specs,
            out_specs=pl.BlockSpec((1, tq, E), lambda b, qi, kv: (b, qi, 0)),
            scratch_shapes=[
                pltpu.VMEM((num_heads, tq, 1), jnp.float32),        # running max m
                pltpu.VMEM((num_heads, tq, 1), jnp.float32),        # running denom l
                pltpu.VMEM((num_heads, tq, head_dim), jnp.float32)  # output acc
            ],
        ),
        compiler_params=pltpu.CompilerParams(
            dimension_semantics=("parallel", "parallel", "arbitrary"),
            # Bounded by tq/tkv (not T); fits v7x's 64 MiB with headroom.
            vmem_limit_bytes=48 * 1024 * 1024,
        ),
    )(*args)


# --------------------------------- Module ------------------------------------
def self_multihead_attention(x, w_in, b_in, w_out, b_out, num_heads,
                             scaling_factor=1, key_padding_mask=None,
                             attn_bias=None):
    # TODO(synk): key_padding_mask / attn_bias (None in the default forward)
    # are not implemented.
    assert key_padding_mask is None and attn_bias is None
    B, T, E = x.shape
    H = num_heads
    D = E // H
    assert D * H == E
    scaling = (D * scaling_factor) ** (-0.5)

    # Fold the 1/sqrt(D) softmax scale into the Q columns of in_proj (free):
    # (x @ (Wq * s) + bq * s) == (x @ Wq + bq) * s.
    q_scale = jnp.concatenate(
        [jnp.full((E,), scaling, dtype=w_in.dtype),
         jnp.ones((2 * E,), dtype=w_in.dtype)])
    w_in_s = w_in * q_scale[None, :]
    b_in_s = b_in * q_scale

    cd = jnp.bfloat16  # MXU-native operands; halves HBM bytes for weights/acts.

    # in_proj: (B*T, E) @ (E, 3E) + b  -> fused qkv, kept as one (B, T, 3E) array.
    qkv = linear(x.reshape(B * T, E).astype(cd), w_in_s.astype(cd), b_in_s,
                 out_dtype=cd).reshape(B, T, 3 * E)

    attn = attention(qkv, H, D)                            # (B, T, E) bf16

    # out_proj (back to the input dtype).
    out = linear(attn.reshape(B * T, E), w_out.astype(cd), b_out,
                 out_dtype=x.dtype).reshape(B, T, E)
    return out


def reference(x, w_in, b_in, w_out, b_out, num_heads, scaling_factor=1):
    """Pure-JAX f32 reference matching the PyTorch forward (eval mode)."""
    B, T, E = x.shape
    H = num_heads
    D = E // H
    scaling = (D * scaling_factor) ** (-0.5)
    qkv = x @ w_in + b_in
    q, k, v = jnp.split(qkv, 3, axis=-1)
    q = q.reshape(B, T, H, D).transpose(0, 2, 1, 3) * scaling
    k = k.reshape(B, T, H, D).transpose(0, 2, 1, 3)
    v = v.reshape(B, T, H, D).transpose(0, 2, 1, 3)
    s = jnp.einsum("bhqd,bhkd->bhqk", q, k)
    p = jax.nn.softmax(s, axis=-1)
    a = jnp.einsum("bhqk,bhkd->bhqd", p, v)
    a = a.transpose(0, 2, 1, 3).reshape(B, T, E)
    return a @ w_out + b_out


# ---------------------------------- Main --------------------------------------
if __name__ == "__main__":
    def run_case(B, T, E, H):
        key = jax.random.PRNGKey(0)
        kx, k1, k2, k3, k4 = jax.random.split(key, 5)
        x = jax.random.normal(kx, (B, T, E), dtype=jnp.float32)
        # nn.Linear-style deterministic init: U(-1/sqrt(fan_in), 1/sqrt(fan_in))
        bound = 1.0 / math.sqrt(E)
        w_in = jax.random.uniform(k1, (E, 3 * E), jnp.float32, -bound, bound)
        b_in = jax.random.uniform(k2, (3 * E,), jnp.float32, -bound, bound)
        w_out = jax.random.uniform(k3, (E, E), jnp.float32, -bound, bound)
        b_out = jax.random.uniform(k4, (E,), jnp.float32, -bound, bound)

        out = self_multihead_attention(x, w_in, b_in, w_out, b_out, num_heads=H)
        out = jax.block_until_ready(out)
        ref = reference(x, w_in, b_in, w_out, b_out, num_heads=H)
        assert out.shape == (B, T, E)
        # bf16 weights/activations + approx reciprocal -> loose tolerance.
        err = float(jnp.max(jnp.abs(out - ref)))
        assert jnp.allclose(out, ref, atol=4e-2, rtol=4e-2), \
            f"mismatch vs reference (max err {err})"

    run_case(2, 8, 128, 4)   # fused-qkv path (E multiple of 128), head_dim=32
    run_case(2, 8, 32, 4)    # fallback path for lane-unaligned E, head_dim=8
    print("KERNEL_OK")
</pallas_src>

<mosaic_0001>
module attributes {stable_mosaic.version = 11 : i64} {
  func.func @_linear_kernel(%arg0: i32, %arg1: i32, %arg2: i32, %arg3: memref<16x128xbf16, #tpu.memory_space<vmem>>, %arg4: memref<128x384xbf16, #tpu.memory_space<vmem>>, %arg5: memref<1x384xf32, #tpu.memory_space<vmem>>, %arg6: memref<16x384xbf16, #tpu.memory_space<vmem>>, %arg7: memref<16x384xf32, #tpu.memory_space<vmem>>) attributes {dimension_semantics = [#tpu.dimension_semantics<parallel>, #tpu.dimension_semantics<parallel>, #tpu.dimension_semantics<arbitrary>], iteration_bounds = array<i64: 1, 1, 1>, scalar_prefetch = 0 : i64, scratch_operands = 1 : i64, tpu.core_type = #tpu.core_type<tc>, window_params = [{transform_indices = @transform_0, window_bounds = array<i64: 16, 128>}, {transform_indices = @transform_1, window_bounds = array<i64: 128, 384>}, {transform_indices = @transform_2, window_bounds = array<i64: 1, 384>}, {transform_indices = @transform_3, window_bounds = array<i64: 16, 384>}]} {
    %c0_i32 = arith.constant 0 : i32
    %0 = arith.cmpi eq, %arg2, %c0_i32 : i32
    %1 = arith.extui %0 : i1 to i32
    %c0_i32_0 = arith.constant 0 : i32
    %2 = arith.cmpi ne, %1, %c0_i32_0 : i32
    scf.if %2 {
      %cst_10 = arith.constant 0.000000e+00 : f32
      %12 = vector.broadcast %cst_10 : f32 to vector<16x384xf32>
      %c0_11 = arith.constant 0 : index
      %c0_12 = arith.constant 0 : index
      %13 = vector.load %arg7[%c0_11, %c0_12] : memref<16x384xf32, #tpu.memory_space<vmem>>, vector<16x384xf32>
      tpu.vector_store %arg7[%c0_11, %c0_12], %12 {strides = array<i32>} : memref<16x384xf32, #tpu.memory_space<vmem>>, vector<16x384xf32>,
    } else {
    }
    %c0 = arith.constant 0 : index
    %c0_1 = arith.constant 0 : index
    %3 = vector.load %arg7[%c0, %c0_1] : memref<16x384xf32, #tpu.memory_space<vmem>>, vector<16x384xf32>
    %c0_2 = arith.constant 0 : index
    %c0_3 = arith.constant 0 : index
    %4 = vector.load %arg3[%c0_2, %c0_3] : memref<16x128xbf16, #tpu.memory_space<vmem>>, vector<16x128xbf16>
    %c0_4 = arith.constant 0 : index
    %c0_5 = arith.constant 0 : index
    %5 = vector.load %arg4[%c0_4, %c0_5] : memref<128x384xbf16, #tpu.memory_space<vmem>>, vector<128x384xbf16>
    %cst = arith.constant dense<0.000000e+00> : vector<16x384xf32>
    %6 = tpu.matmul %4, %5, %cst {dimension_numbers = #tpu.dot_dimension_numbers<[1], [0], [0], [1], [0, 0, 1, 1], [], []>} : vector<16x128xbf16>, vector<128x384xbf16>, vector<16x384xf32> -> vector<16x384xf32>
    %7 = arith.addf %3, %6 : vector<16x384xf32>
    %c0_6 = arith.constant 0 : index
    %c0_7 = arith.constant 0 : index
    %8 = vector.load %arg7[%c0_6, %c0_7] : memref<16x384xf32, #tpu.memory_space<vmem>>, vector<16x384xf32>
    tpu.vector_store %arg7[%c0_6, %c0_7], %7 {strides = array<i32>} : memref<16x384xf32, #tpu.memory_space<vmem>>, vector<16x384xf32>,
    %c0_i32_8 = arith.constant 0 : i32
    %9 = arith.cmpi eq, %arg2, %c0_i32_8 : i32
    %10 = arith.extui %9 : i1 to i32
    %c0_i32_9 = arith.constant 0 : i32
    %11 = arith.cmpi ne, %10, %c0_i32_9 : i32
    scf.if %11 {
      %c0_10 = arith.constant 0 : index
      %c0_11 = arith.constant 0 : index
      %12 = vector.load %arg7[%c0_10, %c0_11] : memref<16x384xf32, #tpu.memory_space<vmem>>, vector<16x384xf32>
      %c0_12 = arith.constant 0 : index
      %c0_13 = arith.constant 0 : index
      %13 = vector.load %arg5[%c0_12, %c0_13] : memref<1x384xf32, #tpu.memory_space<vmem>>, vector<1x384xf32>
      %14 = vector.broadcast %13 : vector<1x384xf32> to vector<16x384xf32>
      %15 = arith.addf %12, %14 : vector<16x384xf32>
      %16 = arith.truncf %15 : vector<16x384xf32> to vector<16x384xbf16>
      %c0_14 = arith.constant 0 : index
      %c0_15 = arith.constant 0 : index
      %17 = vector.load %arg6[%c0_14, %c0_15] : memref<16x384xbf16, #tpu.memory_space<vmem>>, vector<16x384xbf16>
      tpu.vector_store %arg6[%c0_14, %c0_15], %16 {strides = array<i32>} : memref<16x384xbf16, #tpu.memory_space<vmem>>, vector<16x384xbf16>,
    } else {
    }
    return
  }
  func.func @transform_0(%arg0: i32, %arg1: i32, %arg2: i32) -> (i32, i32) {
    %c0_i32 = arith.constant 0 : i32
    return %arg0, %arg2 : i32, i32
  }
  func.func @transform_1(%arg0: i32, %arg1: i32, %arg2: i32) -> (i32, i32) {
    %c0_i32 = arith.constant 0 : i32
    return %arg2, %arg1 : i32, i32
  }
  func.func @transform_2(%arg0: i32, %arg1: i32, %arg2: i32) -> (i32, i32) {
    %c0_i32 = arith.constant 0 : i32
    %c0_i32_0 = arith.constant 0 : i32
    return %c0_i32, %arg1 : i32, i32
  }
  func.func @transform_3(%arg0: i32, %arg1: i32, %arg2: i32) -> (i32, i32) {
    %c0_i32 = arith.constant 0 : i32
    return %arg0, %arg1 : i32, i32
  }
}

</mosaic_0001>

<llo_original>
// kernel: tpu_custom_call.1
$region0: #{tpu_custom_call.1}
  #allocation0 [shape = 'u32[]', space=smem, size = 0x4, offset = 0x4, fixed_abs, tag = 'smem constant byte address 0x4 - core index']
  #allocation1 [shape = 'u32[144,128]{1,0:T(1,128)}', space=vmem, size = 0x12000, scoped, tag = 'internal scratch']
  #allocation2 [shape = 'f32[16,384]{1,0:T(8,128)}', space=vmem, size = 0x6000, scoped, tag = 'scratch operand']
  %s0 = inlined_call_operand.hbm [shape: bf16[16,128], index: 0, kind: input, shape index: {}]
  %s1 = inlined_call_operand.hbm [shape: bf16[128,384], index: 1, kind: input, shape index: {}]
  %s2 = inlined_call_operand.vmem [shape: f32[1,384], index: 2, kind: input, shape index: {}]
  %s3 = inlined_call_operand.hbm [shape: bf16[16,384], index: 3, kind: output, shape index: {}]
  %s4 = sld [smem:[#allocation0]]
  $region38: #{tpu_custom_call.1} parent=0
    _
  %s6 = ssub.s32 1, %s4
  %s7 = scalar_select 0, %s6, %s4
  $region1: #{tpu_custom_call.1} parent=0
    #allocation3 [shape = 'u8[4096]{0}', space=vmem, size = 0x1000, scoped, tag = 'input window, operand 0, single buffered']
    #allocation4 [shape = 's32[1]{0}', space=sflag, size = 0x4, scoped, tag = 'scoped memory for tpu_custom_call.1']
    #allocation5 [shape = 's32[1]{0}', space=sflag, size = 0x4, scoped, tag = 'scoped memory for tpu_custom_call.1']
    #allocation6 [shape = 'u8[98304]{0}', space=vmem, size = 0x18000, scoped, tag = 'input window, operand 1, single buffered']
    #allocation7 [shape = 's32[1]{0}', space=sflag, size = 0x4, scoped, tag = 'scoped memory for tpu_custom_call.1']
    #allocation8 [shape = 'u8[12288]{0}', space=vmem, size = 0x3000, scoped, tag = 'output window, operand 0, single buffered']
    %8 = vsyncpa [#allocation4], 0
    %9 = vsyncpa [#allocation7], 0
    %10 = vsyncpa [#allocation5], 0
    // Predicated region
    $region2: #{tpu_custom_call.1} parent=1 // pred_check
      _
    $region3: #{tpu_custom_call.1} parent=1 // pred_check_branch
      %12 = sbr.rel (0) target = $region5
    $region4: #{tpu_custom_call.1} parent=1 // pred_region
      %s14 = ssub.s32 128, 128
      %15 = vsyncadd [#allocation4], %s14
      %s16 = sshll.u32 [#allocation3], 4
      %s17 = int_to_ptr.vmem [resolvable:$true] %s16
      %22 = dma.hbm_to_vmem [thread:$0]  %s0, 128, %s17, [#allocation4], 64, 64, 4
    $region5: #{tpu_custom_call.1} parent=1 // pred_fallthru
      _
    // Predicated region
    $region6: #{tpu_custom_call.1} parent=1 // pred_check
      _
    $region7: #{tpu_custom_call.1} parent=1 // pred_check_branch
      %24 = sbr.rel (0) target = $region9
    $region8: #{tpu_custom_call.1} parent=1 // pred_region
      %s26 = ssub.s32 3072, 3072
      %27 = vsyncadd [#allocation7], %s26
      %s28 = sshll.u32 [#allocation6], 4
      %s29 = int_to_ptr.vmem [resolvable:$true] %s28
      %34 = dma.hbm_to_vmem [thread:$0]  %s1, 3072, %s29, [#allocation7], 192, 192, 12
    $region9: #{tpu_custom_call.1} parent=1 // pred_fallthru
      _
    // Predicated region
    $region10: #{tpu_custom_call.1} parent=1 // pred_check
      _
    $region11: #{tpu_custom_call.1} parent=1 // pred_check_branch
      %36 = sbr.rel (0) target = $region13
    $region12: #{tpu_custom_call.1} parent=1 // pred_region
      _
    $region13: #{tpu_custom_call.1} parent=1 // pred_fallthru
      _
    // Predicated region
    $region14: #{tpu_custom_call.1} parent=1 // pred_check
      _
    $region15: #{tpu_custom_call.1} parent=1 // pred_check_branch
      %38 = sbr.rel (0) target = $region17
    $region16: #{tpu_custom_call.1} parent=1 // pred_region
      %39 = dma.done [#allocation4], 128
    $region17: #{tpu_custom_call.1} parent=1 // pred_fallthru
      _
    // Predicated region
    $region18: #{tpu_custom_call.1} parent=1 // pred_check
      _
    $region19: #{tpu_custom_call.1} parent=1 // pred_check_branch
      %41 = sbr.rel (0) target = $region21
    $region20: #{tpu_custom_call.1} parent=1 // pred_region
      %42 = dma.done [#allocation7], 3072
    $region21: #{tpu_custom_call.1} parent=1 // pred_fallthru
      _
    %p44 = scmp.eq.s32.totalorder 0, 0
    // Predicated region
    $region22: #{tpu_custom_call.1} parent=1 // pred_check
      %p45 = pneg %p44
    $region23: #{tpu_custom_call.1} parent=1 // pred_check_branch
      %47 = sbr.rel (%p45) target = $region25
    $region24: #{tpu_custom_call.1} parent=1 // pred_region
      %48 = vst [vmem:[#allocation2] sm:$0xff] 0.0
      %49 = vst [vmem:[#allocation2 + $0x8] sm:$0xff] 0.0
      %50 = vst [vmem:[#allocation2 + $0x10] sm:$0xff] 0.0
      %51 = vst [vmem:[#allocation2 + $0x18] sm:$0xff] 0.0
      %52 = vst [vmem:[#allocation2 + $0x20] sm:$0xff] 0.0
      %53 = vst [vmem:[#allocation2 + $0x28] sm:$0xff] 0.0
    $region25: #{tpu_custom_call.1} parent=1 // pred_fallthru
      _
    %v54 = vld [vmem:[#allocation2] sm:$0xff]
    %v55 = vld [vmem:[#allocation2 + $0x8] sm:$0xff]
    %v56 = vld [vmem:[#allocation2 + $0x10] sm:$0xff]
    %v57 = vld [vmem:[#allocation2 + $0x18] sm:$0xff]
    %v58 = vld [vmem:[#allocation2 + $0x20] sm:$0xff]
    %v59 = vld [vmem:[#allocation2 + $0x28] sm:$0xff]
    %v60 = vld [vmem:[#allocation3] sm:$0xf]
    %v61 = vld [vmem:[#allocation3 + $0x4] sm:$0xf]
    %v62 = vld [vmem:[#allocation6] sm:$0xff]
    %v63 = vld [vmem:[#allocation6 + $0x8] sm:$0xf]
    %v64 = vld [vmem:[#allocation6 + $0xc] sm:$0xff]
    %v65 = vld [vmem:[#allocation6 + $0x14] sm:$0xf]
    %v66 = vld [vmem:[#allocation6 + $0x18] sm:$0xff]
    %v67 = vld [vmem:[#allocation6 + $0x20] sm:$0xf]
    %v68 = vld [vmem:[#allocation6 + $0x24] sm:$0xff]
    %v69 = vld [vmem:[#allocation6 + $0x2c] sm:$0xf]
    %v70 = vld [vmem:[#allocation6 + $0x30] sm:$0xff]
    %v71 = vld [vmem:[#allocation6 + $0x38] sm:$0xf]
    %v72 = vld [vmem:[#allocation6 + $0x3c] sm:$0xff]
    %v73 = vld [vmem:[#allocation6 + $0x44] sm:$0xf]
    %v74 = vld [vmem:[#allocation6 + $0x48] sm:$0xff]
    %v75 = vld [vmem:[#allocation6 + $0x50] sm:$0xf]
    %v76 = vld [vmem:[#allocation6 + $0x54] sm:$0xff]
    %v77 = vld [vmem:[#allocation6 + $0x5c] sm:$0xf]
    %v78 = vld [vmem:[#allocation6 + $0x60] sm:$0xff]
    %v79 = vld [vmem:[#allocation6 + $0x68] sm:$0xf]
    %v80 = vld [vmem:[#allocation6 + $0x6c] sm:$0xff]
    %v81 = vld [vmem:[#allocation6 + $0x74] sm:$0xf]
    %v82 = vld [vmem:[#allocation6 + $0x78] sm:$0xff]
    %v83 = vld [vmem:[#allocation6 + $0x80] sm:$0xf]
    %v84 = vld [vmem:[#allocation6 + $0x84] sm:$0xff]
    %v85 = vld [vmem:[#allocation6 + $0x8c] sm:$0xf]
    %v86 = vld [vmem:[#allocation6 + $0x90] sm:$0xff]
    %v87 = vld [vmem:[#allocation6 + $0x98] sm:$0xf]
    %v88 = vld [vmem:[#allocation6 + $0x9c] sm:$0xff]
    %v89 = vld [vmem:[#allocation6 + $0xa4] sm:$0xf]
    %v90 = vld [vmem:[#allocation6 + $0xa8] sm:$0xff]
    %v91 = vld [vmem:[#allocation6 + $0xb0] sm:$0xf]
    %v92 = vld [vmem:[#allocation6 + $0xb4] sm:$0xff]
    %v93 = vld [vmem:[#allocation6 + $0xbc] sm:$0xf]
    %v96 = vunpack.c.l.b16 %v60
    %v97 = vunpack.c.l.b16 %v61
    %v98 = vpack.c.b16 %v97, %v96
    %v132 = vunpack.c.l.b16 %v62
    %v133 = vunpack.c.h.b16 %v62
    %v134 = vunpack.c.l.b16 %v63
    %v135 = vunpack.c.l.b16 %v64
    %v136 = vunpack.c.h.b16 %v64
    %v137 = vunpack.c.l.b16 %v65
    %v138 = vunpack.c.l.b16 %v66
    %v139 = vunpack.c.h.b16 %v66
    %v140 = vunpack.c.l.b16 %v67
    %v141 = vunpack.c.l.b16 %v68
    %v142 = vunpack.c.h.b16 %v68
    %v143 = vunpack.c.l.b16 %v69
    %v144 = vunpack.c.l.b16 %v70
    %v145 = vunpack.c.h.b16 %v70
    %v146 = vunpack.c.l.b16 %v71
    %v147 = vunpack.c.l.b16 %v72
    %v148 = vunpack.c.h.b16 %v72
    %v149 = vunpack.c.l.b16 %v73
    %v150 = vunpack.c.l.b16 %v74
    %v151 = vunpack.c.h.b16 %v74
    %v152 = vunpack.c.l.b16 %v75
    %v153 = vunpack.c.l.b16 %v76
    %v154 = vunpack.c.h.b16 %v76
    %v155 = vunpack.c.l.b16 %v77
    %v156 = vunpack.c.l.b16 %v78
    %v157 = vunpack.c.h.b16 %v78
    %v158 = vunpack.c.l.b16 %v79
    %v159 = vunpack.c.l.b16 %v80
    %v160 = vunpack.c.h.b16 %v80
    %v161 = vunpack.c.l.b16 %v81
    %v162 = vunpack.c.l.b16 %v82
    %v163 = vunpack.c.h.b16 %v82
    %v164 = vunpack.c.l.b16 %v83
    %v165 = vunpack.c.l.b16 %v84
    %v166 = vunpack.c.h.b16 %v84
    %v167 = vunpack.c.l.b16 %v85
    %v168 = vunpack.c.l.b16 %v86
    %v169 = vunpack.c.h.b16 %v86
    %v170 = vunpack.c.l.b16 %v87
    %v171 = vunpack.c.l.b16 %v88
    %v172 = vunpack.c.h.b16 %v88
    %v173 = vunpack.c.l.b16 %v89
    %v174 = vunpack.c.l.b16 %v90
    %v175 = vunpack.c.h.b16 %v90
    %v176 = vunpack.c.l.b16 %v91
    %v177 = vunpack.c.l.b16 %v92
    %v178 = vunpack.c.h.b16 %v92
    %v179 = vunpack.c.l.b16 %v93
    %v180 = vpack.c.b16 %v135, %v132
    %v181 = vpack.c.b16 %v136, %v133
    %v182 = vpack.c.b16 %v137, %v134
    %v183 = vpack.c.b16 %v141, %v138
    %v184 = vpack.c.b16 %v142, %v139
    %v185 = vpack.c.b16 %v143, %v140
    %v186 = vpack.c.b16 %v147, %v144
    %v187 = vpack.c.b16 %v148, %v145
    %v188 = vpack.c.b16 %v149, %v146
    %v189 = vpack.c.b16 %v153, %v150
    %v190 = vpack.c.b16 %v154, %v151
    %v191 = vpack.c.b16 %v155, %v152
    %v192 = vpack.c.b16 %v159, %v156
    %v193 = vpack.c.b16 %v160, %v157
    %v194 = vpack.c.b16 %v161, %v158
    %v195 = vpack.c.b16 %v165, %v162
    %v196 = vpack.c.b16 %v166, %v163
    %v197 = vpack.c.b16 %v167, %v164
    %v198 = vpack.c.b16 %v171, %v168
    %v199 = vpack.c.b16 %v172, %v169
    %v200 = vpack.c.b16 %v173, %v170
    %v201 = vpack.c.b16 %v177, %v174
    %v202 = vpack.c.b16 %v178, %v175
    %v203 = vpack.c.b16 %v179, %v176
    %228 = vmatprep.subr.bf16.mxu0 %v202
    %229 = vmatpush1.bf16.msra.mxu0 %v201
    %230 = vmatprep.subr.bf16.mxu0 %v199
    %231 = vmatpush1.bf16.msra.mxu0 %v198
    %232 = vmatprep.subr.bf16.mxu0 %v196
    %233 = vmatpush1.bf16.msra.mxu0 %v195
    %234 = vmatprep.subr.bf16.mxu0 %v193
    %235 = vmatpush1.bf16.msra.mxu0 %v192
    %236 = vmatprep.subr.bf16.mxu0 %v190
    %237 = vmatpush1.bf16.msra.mxu0 %v189
    %238 = vmatprep.subr.bf16.mxu0 %v187
    %239 = vmatpush1.bf16.msra.mxu0 %v186
    %240 = vmatprep.subr.bf16.mxu0 %v184
    %241 = vmatpush1.bf16.msra.mxu0 %v183
    %242 = vmatprep.subr.bf16.mxu0 %v181
    %243 = vmatpush1.bf16.msra.mxu0 %v180
    %244 = vmatprep.subr.bf16.mxu0 0
    %245 = vmatpush2.bf16.msra.mxu0 0
    %246 = vmatprep.subr.bf16.mxu0 0
    %247 = vmatpush2.bf16.msra.mxu0 0
    %248 = vmatprep.subr.bf16.mxu0 0
    %249 = vmatpush2.bf16.msra.mxu0 0
    %250 = vmatprep.subr.bf16.mxu0 0
    %251 = vmatpush2.bf16.msra.mxu0 0
    %252 = vmatprep.subr.bf16.mxu0 0
    %253 = vmatpush2.bf16.msra.mxu0 0
    %254 = vmatprep.subr.bf16.mxu0 0
    %255 = vmatpush2.bf16.msra.mxu0 0
    %256 = vmatprep.subr.bf16.mxu0 0
    %257 = vmatpush2.bf16.msra.mxu0 0
    %258 = vmatprep.subr.bf16.mxu0 0
    %259 = vmatpush2.bf16.msra.mxu0 0
    %260 = vmatprep.mubr.bf16.mxu0 0
    %261 = vmatmul.mubr.bf16.gmra.mxu0 %v98
    %v262 = vpop.f32.mrf.mxu0
    %v263 = vadd.f32 0.0, %v262
    %v264 = vpop.f32.mrf.mxu0
    %v265 = vadd.f32 0.0, %v264
    %v266 = vpop.f32.mrf.mxu0
    %v267 = vadd.f32 0.0, %v266
    %v268 = vpop.f32.mrf.mxu0
    %v269 = vadd.f32 0.0, %v268
    %270 = vdwg.mxu0
    %271 = vmatprep.subr.bf16.mxu0 0
    %272 = vmatpush1.bf16.msra.mxu0 %v203
    %273 = vmatprep.subr.bf16.mxu0 0
    %274 = vmatpush1.bf16.msra.mxu0 %v200
    %275 = vmatprep.subr.bf16.mxu0 0
    %276 = vmatpush1.bf16.msra.mxu0 %v197
    %277 = vmatprep.subr.bf16.mxu0 0
    %278 = vmatpush1.bf16.msra.mxu0 %v194
    %279 = vmatprep.subr.bf16.mxu0 0
    %280 = vmatpush1.bf16.msra.mxu0 %v191
    %281 = vmatprep.subr.bf16.mxu0 0
    %282 = vmatpush1.bf16.msra.mxu0 %v188
    %283 = vmatprep.subr.bf16.mxu0 0
    %284 = vmatpush1.bf16.msra.mxu0 %v185
    %285 = vmatprep.subr.bf16.mxu0 0
    %286 = vmatpush1.bf16.msra.mxu0 %v182
    %287 = vmatprep.subr.bf16.mxu0 0
    %288 = vmatpush2.bf16.msra.mxu0 0
    %289 = vmatprep.subr.bf16.mxu0 0
    %290 = vmatpush2.bf16.msra.mxu0 0
    %291 = vmatprep.subr.bf16.mxu0 0
    %292 = vmatpush2.bf16.msra.mxu0 0
    %293 = vmatprep.subr.bf16.mxu0 0
    %294 = vmatpush2.bf16.msra.mxu0 0
    %295 = vmatprep.subr.bf16.mxu0 0
    %296 = vmatpush2.bf16.msra.mxu0 0
    %297 = vmatprep.subr.bf16.mxu0 0
    %298 = vmatpush2.bf16.msra.mxu0 0
    %299 = vmatprep.subr.bf16.mxu0 0
    %300 = vmatpush2.bf16.msra.mxu0 0
    %301 = vmatprep.subr.bf16.mxu0 0
    %302 = vmatpush2.bf16.msra.mxu0 0
    %303 = vmatprep.mubr.bf16.mxu0 0
    %304 = vmatmul.mubr.bf16.gmra.mxu0 %v98
    %v305 = vpop.f32.mrf.mxu0
    %v306 = vadd.f32 0.0, %v305
    %v307 = vpop.f32.mrf.mxu0
    %v308 = vpop.f32.mrf.mxu0
    %v309 = vadd.f32 0.0, %v308
    %v310 = vpop.f32.mrf.mxu0
    %311 = vdwg.mxu0
    %v312 = vadd.f32 %v54, %v263
    %v313 = vadd.f32 %v55, %v265
    %v314 = vadd.f32 %v56, %v306
    %v315 = vadd.f32 %v57, %v267
    %v316 = vadd.f32 %v58, %v269
    %v317 = vadd.f32 %v59, %v309
    %318 = vst [vmem:[#allocation2] sm:$0xff] %v312
    %319 = vst [vmem:[#allocation2 + $0x8] sm:$0xff] %v313
    %320 = vst [vmem:[#allocation2 + $0x10] sm:$0xff] %v314
    %321 = vst [vmem:[#allocation2 + $0x18] sm:$0xff] %v315
    %322 = vst [vmem:[#allocation2 + $0x20] sm:$0xff] %v316
    %323 = vst [vmem:[#allocation2 + $0x28] sm:$0xff] %v317
    // Predicated region
    $region26: #{tpu_custom_call.1} parent=1 // pred_check
      %p324 = pneg %p44
    $region27: #{tpu_custom_call.1} parent=1 // pred_check_branch
      %326 = sbr.rel (%p324) target = $region29
    $region28: #{tpu_custom_call.1} parent=1 // pred_region
      %v327 = vld [vmem:[#allocation2] sm:$0xff]
      %v328 = vld [vmem:[#allocation2 + $0x8] sm:$0xff]
      %v329 = vld [vmem:[#allocation2 + $0x10] sm:$0xff]
      %v330 = vld [vmem:[#allocation2 + $0x18] sm:$0xff]
      %v331 = vld [vmem:[#allocation2 + $0x20] sm:$0xff]
      %v332 = vld [vmem:[#allocation2 + $0x28] sm:$0xff]
      %v333 = vld [vmem:[%s2] sm:$0x7]
      %v335 = vlaneseq
      %v336 = vshrl.u32 %v335, 7
      %v337 = vsub.s32 0, %v336
      %v338 = vrot.slane %v333, %v337
      %v339 = vlaneseq
      %v340 = vshrl.u32 %v339, 7
      %v341 = vsub.s32 1, %v340
      %v342 = vrot.slane %v333, %v341
      %v343 = vlaneseq
      %v344 = vshrl.u32 %v343, 7
      %v345 = vsub.s32 2, %v344
      %v346 = vrot.slane %v333, %v345
      %v350 = vadd.f32 %v327, %v338
      %v351 = vadd.f32 %v328, %v342
      %v352 = vadd.f32 %v329, %v346
      %v353 = vadd.f32 %v330, %v338
      %v354 = vadd.f32 %v331, %v342
      %v355 = vadd.f32 %v332, %v346
      %v356 = vpack.c.bf16 %v353, %v350
      %v357 = vpack.c.bf16 %v354, %v351
      %v358 = vpack.c.bf16 %v355, %v352
      %v362 = vunpack.c.l.b16 %v356
      %v363 = vunpack.c.l.b16 %v357
      %v364 = vunpack.c.l.b16 %v358
      %v365 = vunpack.c.h.b16 %v356
      %v366 = vunpack.c.h.b16 %v357
      %v367 = vunpack.c.h.b16 %v358
      %v368 = vpack.c.b16 %v363, %v362
      %v369 = vpack.c.b16 %v364, %v364
      %v370 = vpack.c.b16 %v366, %v365
      %v371 = vpack.c.b16 %v367, %v367
      %376 = vst [vmem:[#allocation8] sm:$0xff] %v368
      %377 = vst [vmem:[#allocation8 + $0x8] sm:$0xf] %v369
      %378 = vst [vmem:[#allocation8 + $0xc] sm:$0xff] %v370
      %379 = vst [vmem:[#allocation8 + $0x14] sm:$0xf] %v371
    $region29: #{tpu_custom_call.1} parent=1 // pred_fallthru
      _
    // Predicated region
    $region30: #{tpu_custom_call.1} parent=1 // pred_check
      _
    $region31: #{tpu_custom_call.1} parent=1 // pred_check_branch
      %381 = sbr.rel (0) target = $region33
    $region32: #{tpu_custom_call.1} parent=1 // pred_region
      %s383 = ssub.s32 384, 384
      %384 = vsyncadd [#allocation5], %s383
      %s385 = sshll.u32 [#allocation8], 4
      %s386 = int_to_ptr.vmem [resolvable:$true] %s385
      %391 = dma.vmem_to_hbm [thread:$0]  %s386, 384, %s3, [#allocation5], 192, 192, 12
    $region33: #{tpu_custom_call.1} parent=1 // pred_fallthru
      _
    // Predicated region
    $region34: #{tpu_custom_call.1} parent=1 // pred_check
      _
    $region35: #{tpu_custom_call.1} parent=1 // pred_check_branch
      %393 = sbr.rel (0) target = $region37
    $region36: #{tpu_custom_call.1} parent=1 // pred_region
      %394 = dma.done [#allocation5], 384
    $region37: #{tpu_custom_call.1} parent=1 // pred_fallthru
      _
    %395 = vsyncpa [#allocation4], 1
    %396 = vsyncpa [#allocation7], 1
    %397 = vsyncpa [#allocation5], 1

</llo_original>
